<compile_context>
chip_gen: v5e
topology: v5e:2x2
jax: 0.10.0
libtpu: 0.0.40
codegen_flags: <defaults>
</compile_context>

<pallas_src>
import jax
import jax.numpy as jnp
from jax.experimental import pallas as pl
from jax.experimental.pallas import tpu as pltpu


def _attention_kernel(x_ref, w_ref, b_ref, o_ref):
    # x_ref: (TB, S, D) VMEM  — gru_output tile
    # w_ref: (1, D)     VMEM  — lane-dense projection row
    # b_ref: (1, 1)     SMEM  — scalar bias
    # o_ref: (TB, D)    VMEM  — attended output tile
    x = x_ref[...].astype(jnp.float32)            # (TB, S, D), f32 compute
    w = w_ref[...].astype(jnp.float32)            # (1, D)
    bias = b_ref[0, 0]

    # Score projection on the VPU/XLU: broadcast-multiply + reduce over the lane axis.
    # scores = tanh(sum_d x * w + b)              -> (TB, S)
    scores = jnp.tanh(jnp.sum(x * w[None, :, :], axis=-1) + bias)

    # Numerically-stable softmax over the sequence axis (PyTorch dim=1).
    m = jnp.max(scores, axis=1, keepdims=True)    # (TB, 1)
    e = jnp.exp(scores - m)                       # (TB, S)
    denom = jnp.sum(e, axis=1, keepdims=True)     # (TB, 1)
    weights = e * pl.reciprocal(denom, approx=True)

    # attended = sum_s weights[s] * x[s]          -> (TB, D), one lane-dense store.
    attended = jnp.sum(weights[:, :, None] * x, axis=1)
    o_ref[...] = attended.astype(o_ref.dtype)


def _pick_batch_tile(B, S, D, itemsize, vmem_budget_bytes):
    """Largest batch tile whose double-buffered input slab fits the VMEM budget.

    Returns either B (whole batch in one step) or a multiple of 8 so the (TB, D)
    output BlockSpec satisfies the (8, 128)/full-dim tiling rule.
    """
    rows = max(1, vmem_budget_bytes // (2 * S * D * itemsize))  # 2x for double buffering
    if B <= rows:
        return B
    return max(8, (rows // 8) * 8)


def attention_forward(gru_output, w, b, *, vmem_budget_bytes=8 * 1024 * 1024):
    """gru_output: (B, S, D); w: (1, D) PyTorch-style Linear weight; b: (1,)."""
    B, S, D = gru_output.shape
    w_row = w.reshape(1, D).astype(jnp.float32)     # lane-dense weight row
    b_smem = b.reshape(1, 1).astype(jnp.float32)    # scalar bias for SMEM

    tb = _pick_batch_tile(B, S, D, gru_output.dtype.itemsize, vmem_budget_bytes)
    grid = (pl.cdiv(B, tb),)

    return pl.pallas_call(
        _attention_kernel,
        out_shape=jax.ShapeDtypeStruct((B, D), gru_output.dtype),
        grid_spec=pltpu.PrefetchScalarGridSpec(
            num_scalar_prefetch=0,
            grid=grid,
            in_specs=[
                pl.BlockSpec((tb, S, D), lambda i: (i, 0, 0)),
                pl.BlockSpec((1, D), lambda i: (0, 0)),
                pl.BlockSpec(memory_space=pltpu.MemorySpace.SMEM),
            ],
            out_specs=pl.BlockSpec((tb, D), lambda i: (i, 0)),
        ),
        compiler_params=pltpu.CompilerParams(
            dimension_semantics=("parallel",),
        ),
    )(gru_output, w_row, b_smem)


def attention_ref(gru_output, w, b):
    """Pure-JAX reference matching the PyTorch module."""
    scores = jnp.tanh(jnp.einsum("bsd,od->bso", gru_output, w) + b)  # (B, S, 1)
    weights = jax.nn.softmax(scores, axis=1)
    return jnp.sum(weights * gru_output, axis=1)                      # (B, D)


if __name__ == "__main__":
    # Small shapes: batch=2, seq=8, hidden=32 -> feature dim D = 2*hidden = 64
    B, S, H = 2, 8, 32
    D = 2 * H

    key = jax.random.PRNGKey(0)
    k_x, k_w, k_b = jax.random.split(key, 3)

    gru_output = jax.random.normal(k_x, (B, S, D), dtype=jnp.float32)
    # Deterministic init of nn.Linear(hidden*2, 1) parameters (shapes: (1, D), (1,))
    w = jax.random.normal(k_w, (1, D), dtype=jnp.float32) * 0.1
    b = jax.random.normal(k_b, (1,), dtype=jnp.float32) * 0.1

    out = attention_forward(gru_output, w, b)
    out = jax.block_until_ready(out)

    ref = attention_ref(gru_output, w, b)
    assert out.shape == (B, D), out.shape
    # Tolerance loosened (approx EUP reciprocal in the softmax normalization).
    assert jnp.allclose(out, ref, atol=2e-3, rtol=2e-3), "mismatch vs reference"

    print("KERNEL_OK")
</pallas_src>

<mosaic_0001>
module attributes {stable_mosaic.version = 11 : i64} {
  func.func @_attention_kernel(%arg0: i32, %arg1: memref<2x8x64xf32, #tpu.memory_space<vmem>>, %arg2: memref<1x64xf32, #tpu.memory_space<vmem>>, %arg3: memref<1x1xf32, #tpu.memory_space<smem>>, %arg4: memref<2x64xf32, #tpu.memory_space<vmem>>) attributes {dimension_semantics = [#tpu.dimension_semantics<parallel>], iteration_bounds = array<i64: 1>, scalar_prefetch = 0 : i64, scratch_operands = 0 : i64, tpu.core_type = #tpu.core_type<tc>, window_params = [{transform_indices = @transform_0, window_bounds = array<i64: 2, 8, 64>}, {pipeline_mode = #tpu.pipeline_mode<synchronous>, transform_indices = @transform_1, window_bounds = array<i64: 1, 64>}, {transform_indices = @transform_2, window_bounds = array<i64: 1, 1>}, {transform_indices = @transform_3, window_bounds = array<i64: 2, 64>}]} {
    %c0 = arith.constant 0 : index
    %c0_0 = arith.constant 0 : index
    %c0_1 = arith.constant 0 : index
    %0 = vector.load %arg1[%c0, %c0_0, %c0_1] : memref<2x8x64xf32, #tpu.memory_space<vmem>>, vector<2x8x64xf32>
    %c0_2 = arith.constant 0 : index
    %c0_3 = arith.constant 0 : index
    %1 = vector.load %arg2[%c0_2, %c0_3] : memref<1x64xf32, #tpu.memory_space<vmem>>, vector<1x64xf32>
    %c0_4 = arith.constant 0 : index
    %c0_5 = arith.constant 0 : index
    %2 = memref.load %arg3[%c0_4, %c0_5] : memref<1x1xf32, #tpu.memory_space<smem>>
    %3 = vector.shape_cast %1 : vector<1x64xf32> to vector<1x1x64xf32>
    %4 = vector.broadcast %3 : vector<1x1x64xf32> to vector<2x8x64xf32>
    %5 = arith.mulf %0, %4 : vector<2x8x64xf32>
    %cst = arith.constant dense<0.000000e+00> : vector<2x8xf32>
    %6 = vector.multi_reduction <add>, %5, %cst [2] : vector<2x8x64xf32> to vector<2x8xf32>
    %7 = vector.broadcast %2 : f32 to vector<2x8xf32>
    %8 = arith.addf %6, %7 : vector<2x8xf32>
    %9 = math.tanh %8 : vector<2x8xf32>
    %cst_6 = arith.constant dense<0xFF800000> : vector<2xf32>
    %10 = vector.multi_reduction <maximumf>, %9, %cst_6 [1] : vector<2x8xf32> to vector<2xf32>
    %11 = vector.shape_cast %10 : vector<2xf32> to vector<2x1xf32>
    %12 = vector.broadcast %11 : vector<2x1xf32> to vector<2x8xf32>
    %13 = arith.subf %9, %12 : vector<2x8xf32>
    %14 = math.exp %13 : vector<2x8xf32>
    %cst_7 = arith.constant dense<0.000000e+00> : vector<2xf32>
    %15 = vector.multi_reduction <add>, %14, %cst_7 [1] : vector<2x8xf32> to vector<2xf32>
    %16 = vector.shape_cast %15 : vector<2xf32> to vector<2x1xf32>
    %17 = tpu.reciprocal %16 {approx = true} : vector<2x1xf32> -> vector<2x1xf32>
    %18 = vector.broadcast %17 : vector<2x1xf32> to vector<2x8xf32>
    %19 = arith.mulf %14, %18 : vector<2x8xf32>
    %20 = vector.shape_cast %19 : vector<2x8xf32> to vector<2x8x1xf32>
    %21 = vector.broadcast %20 : vector<2x8x1xf32> to vector<2x8x64xf32>
    %22 = arith.mulf %21, %0 : vector<2x8x64xf32>
    %cst_8 = arith.constant dense<0.000000e+00> : vector<2x64xf32>
    %23 = vector.multi_reduction <add>, %22, %cst_8 [1] : vector<2x8x64xf32> to vector<2x64xf32>
    %c0_9 = arith.constant 0 : index
    %c0_10 = arith.constant 0 : index
    %24 = vector.load %arg4[%c0_9, %c0_10] : memref<2x64xf32, #tpu.memory_space<vmem>>, vector<2x64xf32>
    tpu.vector_store %arg4[%c0_9, %c0_10], %23 {strides = array<i32>} : memref<2x64xf32, #tpu.memory_space<vmem>>, vector<2x64xf32>,
    return
  }
  func.func @transform_0(%arg0: i32) -> (i32, i32, i32) {
    %c0_i32 = arith.constant 0 : i32
    %c0_i32_0 = arith.constant 0 : i32
    %c0_i32_1 = arith.constant 0 : i32
    return %arg0, %c0_i32, %c0_i32_0 : i32, i32, i32
  }
  func.func @transform_1(%arg0: i32) -> (i32, i32) {
    %c0_i32 = arith.constant 0 : i32
    %c0_i32_0 = arith.constant 0 : i32
    %c0_i32_1 = arith.constant 0 : i32
    return %c0_i32, %c0_i32_0 : i32, i32
  }
  func.func @transform_2(%arg0: i32) -> (i32, i32) {
    %c0_i32 = arith.constant 0 : i32
    %c0_i32_0 = arith.constant 0 : i32
    %c0_i32_1 = arith.constant 0 : i32
    return %c0_i32, %c0_i32_0 : i32, i32
  }
  func.func @transform_3(%arg0: i32) -> (i32, i32) {
    %c0_i32 = arith.constant 0 : i32
    %c0_i32_0 = arith.constant 0 : i32
    return %arg0, %c0_i32 : i32, i32
  }
}

</mosaic_0001>

<llo_original>
// kernel: tpu_custom_call.1
$region0: #{tpu_custom_call.1}
  #allocation0 [shape = 'u32[]', space=smem, size = 0x4, offset = 0x4, fixed_abs, tag = 'smem constant byte address 0x4 - core index']
  #allocation1 [shape = 'u32[72,128]{1,0:T(1,128)}', space=vmem, size = 0x9000, scoped, tag = 'internal scratch']
  #allocation2 [shape = 'f32[1,1]{1,0:T(1,128)S(6)}', space=smem, size = 0x200, scoped, tag = 'scoped memory for tpu_custom_call.1']
  %s0 = inlined_call_operand.hbm [shape: f32[2,8,64], index: 0, kind: input, shape index: {}]
  %s1 = inlined_call_operand.vmem [shape: f32[1,64], index: 1, kind: input, shape index: {}]
  %s2 = inlined_call_operand.<no memory space> [shape: f32[1,1], index: 2, kind: input, shape index: {}]
  %s3 = inlined_call_operand.hbm [shape: f32[2,64], index: 3, kind: output, shape index: {}]
  %s4 = sld [smem:[#allocation0]]
  $region26: #{tpu_custom_call.1} parent=0
    _
  %s6 = ssub.s32 1, %s4
  %s7 = scalar_select 0, %s6, %s4
  %8 = sst [smem:[#allocation2]] %s2
  $region1: #{tpu_custom_call.1} parent=0
    #allocation3 [shape = 'u8[8192]{0}', space=vmem, size = 0x2000, scoped, tag = 'input window, operand 0, single buffered']
    #allocation4 [shape = 's32[1]{0}', space=sflag, size = 0x4, scoped, tag = 'scoped memory for tpu_custom_call.1']
    #allocation5 [shape = 's32[1]{0}', space=sflag, size = 0x4, scoped, tag = 'scoped memory for tpu_custom_call.1']
    #allocation6 [shape = 'u8[1024]{0}', space=vmem, size = 0x400, scoped, tag = 'output window, operand 0, single buffered']
    %9 = vsyncpa [#allocation4], 0
    %10 = vsyncpa [#allocation5], 0
    // Predicated region
    $region2: #{tpu_custom_call.1} parent=1 // pred_check
      _
    $region3: #{tpu_custom_call.1} parent=1 // pred_check_branch
      %12 = sbr.rel (0) target = $region5
    $region4: #{tpu_custom_call.1} parent=1 // pred_region
      %14 = vsyncadd [#allocation4], 0
      %s15 = sshll.u32 %s0, 4
      %s16 = int_to_ptr.hbm [resolvable:$true] %s15
      %s17 = sshll.u32 [#allocation3], 4
      %s18 = int_to_ptr.vmem [resolvable:$true] %s17
      %23 = dma.hbm_to_vmem [thread:$0]  %s16, 256, %s18, [#allocation4], 128, 128, 8
    $region5: #{tpu_custom_call.1} parent=1 // pred_fallthru
      _
    // Predicated region
    $region6: #{tpu_custom_call.1} parent=1 // pred_check
      _
    $region7: #{tpu_custom_call.1} parent=1 // pred_check_branch
      %25 = sbr.rel (0) target = $region9
    $region8: #{tpu_custom_call.1} parent=1 // pred_region
      _
    $region9: #{tpu_custom_call.1} parent=1 // pred_fallthru
      _
    // Predicated region
    $region10: #{tpu_custom_call.1} parent=1 // pred_check
      _
    $region11: #{tpu_custom_call.1} parent=1 // pred_check_branch
      %27 = sbr.rel (0) target = $region13
    $region12: #{tpu_custom_call.1} parent=1 // pred_region
      _
    $region13: #{tpu_custom_call.1} parent=1 // pred_fallthru
      _
    // Predicated region
    $region14: #{tpu_custom_call.1} parent=1 // pred_check
      _
    $region15: #{tpu_custom_call.1} parent=1 // pred_check_branch
      %29 = sbr.rel (0) target = $region17
    $region16: #{tpu_custom_call.1} parent=1 // pred_region
      %31 = dma.done [#allocation4], 256
    $region17: #{tpu_custom_call.1} parent=1 // pred_fallthru
      _
    %v32 = vld [vmem:[#allocation3] sm:$0xff]
    %v33 = vld [vmem:[#allocation3 + $0x8] sm:$0xff]
    %v34 = vld [vmem:[%s1] sm:$0x1]
    %s35 = sld [smem:[#allocation2]]
    %v37 = vperm.slane %v34, 0
    %v39 = vmul.f32 %v32, %v37
    %v40 = vmul.f32 %v33, %v37
    %vm41 = vcmask 523264
    %v42 = vsel %vm41, %v39, 0.0
    %43 = vadd.xlane.f32.xlu0 %v42
    %v44 = vpop.xlane.xlu0 %43
    %v45 = vsel %vm41, %v40, 0.0
    %46 = vadd.xlane.f32.xlu0 %v45
    %v47 = vpop.xlane.xlu0 %46
    %v48 = vstv %s35
    %v49 = vadd.f32 %v44, %v48
    %v50 = vadd.f32 %v47, %v48
    %v51 = vtanh.pop %v49
    %v52 = vtanh.pop %v50
    %v55 = vlaneseq
    %v56 = vand.u32 %v55, 127
    %v57 = vperm.slane %v51, %v56
    %v58 = vperm.slane %v52, %v56
    %vm59 = vcmask 1041409
    %v60 = vsel %vm59, %v58, %v57
    %vm62 = vcmask 58368
    %v63 = vsel %vm62, %v60, -inf
    %64 = vmax.xlane.f32.xlu0 %v63
    %v65 = vpop.xlane.xlu0 %64
    %v67 = vperm.slane %v65, 0
    %v68 = vperm.slane %v65, 1
    %v71 = vsub.f32 %v51, %v67
    %v72 = vsub.f32 %v52, %v68
    %v73 = vmul.f32 %v71, 1.442695
    %v74 = vpow.pop %v73
    %v75 = vmul.f32 %v72, 1.442695
    %v76 = vpow.pop %v75
    %79 = vset.pattern.permute.xlu0 0
    %80 = vperm.xlu0 %79, %v74
    %v81 = vpop.permute.xlu0 %80
    %82 = vset.pattern.permute.xlu0 0
    %83 = vperm.xlu0 %82, %v76
    %v84 = vpop.permute.xlu0 %83
    %v85 = vperm.slane %v81, %v56
    %v86 = vperm.slane %v84, %v56
    %v87 = vsel %vm59, %v86, %v85
    %v89 = vsel %vm62, %v87, 0.0
    %90 = vadd.xlane.f32.xlu0 %v89
    %v91 = vpop.xlane.xlu0 %90
    %v92 = vrcp.pop %v91
    %v94 = vperm.slane %v92, 0
    %v95 = vperm.slane %v92, 1
    %v98 = vmul.f32 %v74, %v94
    %v99 = vmul.f32 %v76, %v95
    %101 = vset.pattern.permute.xlu0 0
    %102 = vperm.xlu0 %101, %v98
    %v103 = vpop.permute.xlu0 %102
    %106 = vset.pattern.permute.xlu0 0
    %107 = vperm.xlu0 %106, %v99
    %v108 = vpop.permute.xlu0 %107
    %v110 = vmul.f32 %v103, %v32
    %v111 = vmul.f32 %v108, %v33
    %v112 = vsel %vm41, %v110, 0.0
    %v113 = vrot.slane %v112, 4
    %v114 = vadd.f32 %v112, %v113
    %v115 = vrot.slane %v114, 2
    %v116 = vadd.f32 %v114, %v115
    %v117 = vrot.slane %v116, 1
    %v118 = vadd.f32 %v116, %v117
    %v119 = vsel %vm41, %v111, 0.0
    %v120 = vrot.slane %v119, 4
    %v121 = vadd.f32 %v119, %v120
    %v122 = vrot.slane %v121, 2
    %v123 = vadd.f32 %v121, %v122
    %v124 = vrot.slane %v123, 1
    %v125 = vadd.f32 %v123, %v124
    %v128 = vsel %vm59, %v125, %v118
    %vm130 = vcmask 517120
    %131 = vst.msk [vmem:[#allocation6] sm:$0x3] %vm130, %v128
    // Predicated region
    $region18: #{tpu_custom_call.1} parent=1 // pred_check
      _
    $region19: #{tpu_custom_call.1} parent=1 // pred_check_branch
      %133 = sbr.rel (0) target = $region21
    $region20: #{tpu_custom_call.1} parent=1 // pred_region
      %135 = vsyncadd [#allocation5], 0
      %s137 = sshll.u32 [#allocation6], 4
      %s138 = int_to_ptr.vmem [resolvable:$true] %s137
      %s139 = sshll.u32 %s3, 4
      %s140 = int_to_ptr.hbm [resolvable:$true] %s139
      %142 = dma.vmem_to_hbm [thread:$0]  %s138, 32, %s140, [#allocation5]
    $region21: #{tpu_custom_call.1} parent=1 // pred_fallthru
      _
    // Predicated region
    $region22: #{tpu_custom_call.1} parent=1 // pred_check
      _
    $region23: #{tpu_custom_call.1} parent=1 // pred_check_branch
      %144 = sbr.rel (0) target = $region25
    $region24: #{tpu_custom_call.1} parent=1 // pred_region
      %146 = dma.done [#allocation5], 32
    $region25: #{tpu_custom_call.1} parent=1 // pred_fallthru
      _
    %147 = vsyncpa [#allocation4], 1
    %148 = vsyncpa [#allocation5], 1

</llo_original>
